<compile_context>
chip_gen: v5e
topology: v5e:2x2
jax: 0.10.0
libtpu: 0.0.40
codegen_flags: <defaults>
</compile_context>

<pallas_src>
import jax
import jax.numpy as jnp
import numpy as np
from jax.experimental import pallas as pl
from jax.experimental.pallas import tpu as pltpu


# ----------------------------------------------------------------------------
# Config (consistent with the module's __init__ asserts)
# ----------------------------------------------------------------------------
NUM_ATOM_TYPE = 10                         # config.num_atom_type
NUM_ATOM_FEAT = 4                          # config.num_atom_feat
FEAT_ONEHOT = NUM_ATOM_FEAT * 10           # 40
H_DIM = NUM_ATOM_TYPE + 2 * FEAT_ONEHOT    # 90 : width of one-hot h
HIDDEN_DIM = 32                            # config.hidden_dim (even)
HIDDEN_CHANNELS = 32                       # config.hidden_channels == hidden_dim
ALPHA, BETA, GAMMA = 1.7, 0.9, 0.3         # solver.alpha / beta / gamma
EPS = 1e-12  # rsqrt guard; documented divergence vs. reference at d -> 0

NODE_OUT_W = 128                           # packed node slab width (lane-dense)
Z_OFF = NODE_OUT_W - HIDDEN_CHANNELS       # 96 : z_t lives in lanes 96..127
T_LANE = H_DIM                             # 90 : t lives in lane 90
NUM_FEAT_COLS = 1 + 2 * NUM_ATOM_FEAT + 1  # 10 : 9 int features + bitcast t
EDGE_OUT_ROWS = 8                          # d, dT, q1..q3, qT1..qT3


def _round_up(x, m):
    return ((x + m - 1) // m) * m


def _cdiv(a, b):
    return -(-a // b)


def _select_caps():
    """Generation-aware block caps / VMEM limit (all values safe defaults)."""
    try:
        kind = jax.devices()[0].device_kind.lower()
    except Exception:  # pragma: no cover - no accelerator during tracing tests
        kind = ""
    if ("v5" in kind) or ("v6" in kind):
        # 128 MiB physical VMEM: larger blocks amortize the ~0.35us step cost.
        return 8192, 65536, 64 * 1024 * 1024
    # v7x (64 MiB VMEM) and unknown chips: conservative caps, >=2 grid steps.
    return 4096, 32768, 32 * 1024 * 1024


NODE_BLOCK_CAP, EDGE_BLOCK_CAP, VMEM_LIMIT = _select_caps()


def _pick_block(size, cap, gran):
    """Balanced block: multiple of `gran`, divides the padded extent evenly,
    and uses >=2 grid steps when possible (so both v7x TCs get work)."""
    size_g = _round_up(max(int(size), 1), gran)
    nsteps = max(1, _cdiv(size_g, cap))
    if nsteps == 1 and size_g >= 2 * gran:
        nsteps = 2
    block = _round_up(_cdiv(size_g, nsteps), gran)
    padded = _round_up(size_g, block)
    return block, padded


# ----------------------------------------------------------------------------
# Kernel 1: node path (AtomEncoder + z_t_embedding, fused)
#   input : feats (B, 10) int32 = [9 global one-hot indices in [0,90) | t bits]
#           w_hz_pad (128, 128), w_t_pad (1, 128), b_hz_pad (1, 128)
#             (pre-fused weights, real 32 columns at lanes 96..127, else 0)
#   output: (B, 128) packed = [h_onehot(90) | t(1) | zeros(5) | z_t(32)]
# ----------------------------------------------------------------------------
def node_kernel(feat_ref, w_hz_ref, w_t_ref, b_hz_ref, out_ref):
    B = feat_ref.shape[0]
    feats = feat_ref[...]                                         # (B, 10) i32
    lane = jax.lax.broadcasted_iota(jnp.int32, (B, NODE_OUT_W), 1)

    # 9 dense 128-lane compares -> the one-hot slab, lanes 90..127 stay zero.
    h_oh = (feats[:, 0:1] == lane).astype(jnp.float32)
    for j in range(1, 1 + 2 * NUM_ATOM_FEAT):
        h_oh = h_oh + (feats[:, j:j + 1] == lane).astype(jnp.float32)

    # per-node time, reinterpreted from the packed int column
    t = pltpu.bitcast(feats[:, NUM_FEAT_COLS - 1:NUM_FEAT_COLS], jnp.float32)

    # z_t = [AtomEncoder(one-hots), t] @ W_zt + b_zt, fully fused into one MXU
    # contraction whose padded weights place the result at lanes 96..127.
    z_slab = (jnp.dot(h_oh, w_hz_ref[...], preferred_element_type=jnp.float32)
              + t * w_t_ref[...] + b_hz_ref[...])                 # (B, 128)

    t_slab = jnp.where(lane == T_LANE, t, 0.0)                    # t at lane 90
    out_ref[...] = h_oh + t_slab + z_slab                         # dense store


def _node_embedding(feats, w_hz_pad, w_t_pad, b_hz_pad):
    natoms = feats.shape[0]
    block_n, n_pad = _pick_block(natoms, NODE_BLOCK_CAP, 8)
    if n_pad != natoms:
        feats = jnp.pad(feats, ((0, n_pad - natoms), (0, 0)))

    out = pl.pallas_call(
        node_kernel,
        out_shape=jax.ShapeDtypeStruct((n_pad, NODE_OUT_W), jnp.float32),
        grid=(n_pad // block_n,),
        in_specs=[
            pl.BlockSpec((block_n, NUM_FEAT_COLS), lambda i: (i, 0)),
            pl.BlockSpec((NODE_OUT_W, NODE_OUT_W), lambda i: (0, 0)),  # resident
            pl.BlockSpec((1, NODE_OUT_W), lambda i: (0, 0)),
            pl.BlockSpec((1, NODE_OUT_W), lambda i: (0, 0)),
        ],
        out_specs=pl.BlockSpec((block_n, NODE_OUT_W), lambda i: (i, 0)),
        compiler_params=pltpu.CompilerParams(
            dimension_semantics=("parallel",),
            vmem_limit_bytes=VMEM_LIMIT),
    )(feats, w_hz_pad, w_t_pad, b_hz_pad)
    return out[:natoms]


# ----------------------------------------------------------------------------
# Kernel 2: edge path (get_distance + append_coordinate), fully dense.
#   inputs : pr, pc (6, R, 128) = per-component gathered coordinates
#            [x, y, z, xT, yT, zT] with edges spread over sublanes x lanes
#   output : (8, R, 128) packed planes = [d, d_T, q1, q2, q3, qT1, qT2, qT3]
# ----------------------------------------------------------------------------
def edge_kernel(pr_ref, pc_ref, out_ref):
    diff = pr_ref[...] - pc_ref[...]                   # (6, tR, 128)
    sq = diff * diff
    d2 = sq[0] + sq[1] + sq[2]                         # (tR, 128) dense
    dt2 = sq[3] + sq[4] + sq[5]
    inv_d = jax.lax.rsqrt(d2 + EPS)                    # EUP slot
    inv_dt = jax.lax.rsqrt(dt2 + EPS)
    d = d2 * inv_d
    dt = dt2 * inv_dt
    out_ref[0, :, :] = d
    out_ref[1, :, :] = dt
    out_ref[2, :, :] = jnp.exp(-ALPHA * (d - 1.0))
    out_ref[3, :, :] = BETA * inv_d
    out_ref[4, :, :] = GAMMA * d
    out_ref[5, :, :] = jnp.exp(-ALPHA * (dt - 1.0))
    out_ref[6, :, :] = BETA * inv_dt
    out_ref[7, :, :] = GAMMA * dt


def _edge_features(pos, pos_T, row, col):
    E = row.shape[0]
    block_e, e_pad = _pick_block(E, EDGE_BLOCK_CAP, 1024)  # 1024 = 8 sublanes * 128 lanes
    R = e_pad // 128
    tR = block_e // 128
    pad = e_pad - E
    row_p = jnp.pad(row.astype(jnp.int32), (0, pad))
    col_p = jnp.pad(col.astype(jnp.int32), (0, pad))

    # Six cheap 1-D per-component gathers -> kernel-native (6, R, 128) layout
    # (no minor-axis gather, no big transpose).
    comps = [pos[:, 0], pos[:, 1], pos[:, 2],
             pos_T[:, 0], pos_T[:, 1], pos_T[:, 2]]
    pr = jnp.stack([c[row_p] for c in comps], axis=0).reshape(6, R, 128)
    pc = jnp.stack([c[col_p] for c in comps], axis=0).reshape(6, R, 128)

    out = pl.pallas_call(
        edge_kernel,
        out_shape=jax.ShapeDtypeStruct((EDGE_OUT_ROWS, R, 128), jnp.float32),
        grid=(R // tR,),
        in_specs=[
            pl.BlockSpec((6, tR, 128), lambda i: (0, i, 0)),
            pl.BlockSpec((6, tR, 128), lambda i: (0, i, 0)),
        ],
        out_specs=pl.BlockSpec((EDGE_OUT_ROWS, tR, 128), lambda i: (0, i, 0)),
        compiler_params=pltpu.CompilerParams(
            dimension_semantics=("parallel",),
            vmem_limit_bytes=VMEM_LIMIT),
    )(pr, pc)
    return out.reshape(EDGE_OUT_ROWS, e_pad)[:, :E]


# ----------------------------------------------------------------------------
# Forward, mirroring EquivariantEncoderEpsNetwork.forward
# (time_embedding=True, append_pos_init=True, reduced_dimension=False,
#  append_coordinate=True)
# ----------------------------------------------------------------------------
@jax.jit
def equivariant_encoder_forward(params, atom_type, r_feat, p_feat,
                                tt, batch, pos, pos_T, edge_index):
    hp = jax.lax.Precision.HIGHEST

    # --- fuse AtomEncoder + z_t_embedding weights (tiny, once per call) ---
    w_atom, b_atom = params["w_atom"], params["b_atom"]      # (10,16), (1,16)
    w_feat, b_feat = params["w_feat"], params["b_feat"]      # (40,16), (1,16)
    w_zt, b_zt = params["w_zt"], params["b_zt"]              # (33,32), (1,32)
    h2 = w_atom.shape[1]
    zeros_a = jnp.zeros((NUM_ATOM_TYPE, h2), jnp.float32)
    zeros_f = jnp.zeros((FEAT_ONEHOT, h2), jnp.float32)
    # z = [atom_emb + emb_r | emb_p - emb_r]  ==  h_onehot @ W_comb + b_comb
    w_comb = jnp.concatenate([
        jnp.concatenate([w_atom, zeros_a], axis=1),
        jnp.concatenate([w_feat, -w_feat], axis=1),
        jnp.concatenate([zeros_f, w_feat], axis=1)], axis=0)           # (90, 32)
    b_comb = jnp.concatenate([b_atom + b_feat, jnp.zeros_like(b_feat)], axis=1)
    w_z, w_t = w_zt[:HIDDEN_DIM], w_zt[HIDDEN_DIM:]                    # (32,32),(1,32)
    w_hz = jnp.dot(w_comb, w_z, precision=hp)                          # (90, 32)
    b_hz = jnp.dot(b_comb, w_z, precision=hp) + b_zt                   # (1, 32)

    # pre-pad to 128 output lanes: real columns at lanes 96..127, zero elsewhere
    w_hz_pad = jnp.zeros((NODE_OUT_W, NODE_OUT_W), jnp.float32)
    w_hz_pad = w_hz_pad.at[:H_DIM, Z_OFF:].set(w_hz)
    w_t_pad = jnp.zeros((1, NODE_OUT_W), jnp.float32).at[:, Z_OFF:].set(w_t)
    b_hz_pad = jnp.zeros((1, NODE_OUT_W), jnp.float32).at[:, Z_OFF:].set(b_hz)

    # --- node inputs: packed int features (global one-hot indices) + t bits ---
    t_node = tt[batch].astype(jnp.float32)                             # (N,)
    t_bits = jax.lax.bitcast_convert_type(t_node, jnp.int32)           # (N,)
    offs_r = jnp.arange(NUM_ATOM_FEAT, dtype=jnp.int32) * 10 + NUM_ATOM_TYPE
    offs_p = offs_r + FEAT_ONEHOT
    feats = jnp.concatenate([
        atom_type.astype(jnp.int32)[:, None],
        r_feat.astype(jnp.int32) + offs_r[None, :],
        p_feat.astype(jnp.int32) + offs_p[None, :],
        t_bits[:, None]], axis=1)                                      # (N, 10)

    node_out = _node_embedding(feats, w_hz_pad, w_t_pad, b_hz_pad)     # (N, 128)
    h_t = node_out[:, :H_DIM + 1]                                      # (N, 91)
    z_t = node_out[:, Z_OFF:]                                          # (N, 32)

    # --- edge path: packed rows 0=dist, 1=dist_T, 2:5=q, 5:8=q_T ---
    row, col = edge_index[0], edge_index[1]
    edge_packed = _edge_features(pos, pos_T, row, col)                 # (8, E)

    return h_t, z_t, edge_packed


# ----------------------------------------------------------------------------
# Deterministic parameter init (PyTorch nn.Linear shapes, pre-transposed)
# ----------------------------------------------------------------------------
def init_params(key):
    ks = jax.random.split(key, 6)
    h2 = HIDDEN_DIM // 2

    def unif(kk, shape, fan_in):
        b = 1.0 / float(np.sqrt(fan_in))
        return jax.random.uniform(kk, shape, jnp.float32, -b, b)

    return {
        "w_atom": unif(ks[0], (NUM_ATOM_TYPE, h2), NUM_ATOM_TYPE),
        "b_atom": unif(ks[1], (1, h2), NUM_ATOM_TYPE),
        "w_feat": unif(ks[2], (FEAT_ONEHOT, h2), FEAT_ONEHOT),
        "b_feat": unif(ks[3], (1, h2), FEAT_ONEHOT),
        "w_zt": unif(ks[4], (HIDDEN_DIM + 1, HIDDEN_CHANNELS), HIDDEN_DIM + 1),
        "b_zt": unif(ks[5], (1, HIDDEN_CHANNELS), HIDDEN_DIM + 1),
    }


# ----------------------------------------------------------------------------
# Pure-JAX reference (mirrors the PyTorch math) for correctness checking
# ----------------------------------------------------------------------------
def reference_forward(params, atom_type, r_feat, p_feat, tt, batch,
                      pos, pos_T, edge_index):
    def mm(a, b):
        return jnp.dot(a, b, precision=jax.lax.Precision.HIGHEST)

    natoms = atom_type.shape[0]
    atom_oh = jax.nn.one_hot(atom_type, NUM_ATOM_TYPE, dtype=jnp.float32)
    r_oh = jax.nn.one_hot(r_feat, 10, dtype=jnp.float32).reshape(natoms, FEAT_ONEHOT)
    p_oh = jax.nn.one_hot(p_feat, 10, dtype=jnp.float32).reshape(natoms, FEAT_ONEHOT)
    atom_emb = mm(atom_oh, params["w_atom"]) + params["b_atom"]
    emb_r = mm(r_oh, params["w_feat"]) + params["b_feat"]
    emb_p = mm(p_oh, params["w_feat"]) + params["b_feat"]
    z = jnp.concatenate([atom_emb + emb_r, emb_p - emb_r], axis=-1)
    t_node = tt[batch][:, None].astype(pos.dtype)
    h = jnp.concatenate([atom_oh, r_oh, p_oh], axis=-1)
    h_t = jnp.concatenate([h, t_node], axis=-1)
    z_t = mm(jnp.concatenate([z, t_node], axis=-1), params["w_zt"]) + params["b_zt"]
    row, col = edge_index[0], edge_index[1]
    d = jnp.linalg.norm(pos[row] - pos[col], axis=-1, keepdims=True)
    dT = jnp.linalg.norm(pos_T[row] - pos_T[col], axis=-1, keepdims=True)
    q = jnp.concatenate([jnp.exp(-ALPHA * (d - 1.0)), BETA / d, GAMMA * d], axis=-1)
    qT = jnp.concatenate([jnp.exp(-ALPHA * (dT - 1.0)), BETA / dT, GAMMA * dT], axis=-1)
    edge_attr = jnp.concatenate([q, qT], axis=-1)
    return h_t, z_t, edge_attr, d, dT


# ----------------------------------------------------------------------------
if __name__ == "__main__":
    key = jax.random.PRNGKey(0)
    kp, ka, kr, kpf, kt, kpos, kposT = jax.random.split(key, 7)

    params = init_params(kp)

    # 2 graphs x 8 atoms
    n_per_graph, n_graphs = 8, 2
    natoms = n_per_graph * n_graphs
    atom_type = jax.random.randint(ka, (natoms,), 0, NUM_ATOM_TYPE)
    r_feat = jax.random.randint(kr, (natoms, NUM_ATOM_FEAT), 0, 10)
    p_feat = jax.random.randint(kpf, (natoms, NUM_ATOM_FEAT), 0, 10)
    tt = jax.random.uniform(kt, (n_graphs,), jnp.float32)
    batch = jnp.repeat(jnp.arange(n_graphs), n_per_graph)
    pos = jax.random.normal(kpos, (natoms, 3), jnp.float32)
    pos_T = jax.random.normal(kposT, (natoms, 3), jnp.float32)

    # full upper-triangle edges within each graph (bond_index)
    rows, cols = [], []
    for g in range(n_graphs):
        off = g * n_per_graph
        for i in range(n_per_graph):
            for j in range(i + 1, n_per_graph):
                rows.append(off + i)
                cols.append(off + j)
    edge_index = jnp.array([rows, cols], dtype=jnp.int32)
    E = edge_index.shape[1]

    h_t, z_t, edge_packed = jax.block_until_ready(
        equivariant_encoder_forward(params, atom_type, r_feat, p_feat,
                                    tt, batch, pos, pos_T, edge_index))

    assert h_t.shape == (natoms, H_DIM + 1)
    assert z_t.shape == (natoms, HIDDEN_CHANNELS)
    assert edge_packed.shape == (EDGE_OUT_ROWS, E)

    dist = edge_packed[0:1, :].T          # (E, 1)
    dist_T = edge_packed[1:2, :].T        # (E, 1)
    edge_attr = edge_packed[2:8, :].T     # (E, 6) = [q | q_T]

    h_t_ref, z_t_ref, edge_attr_ref, d_ref, dT_ref = reference_forward(
        params, atom_type, r_feat, p_feat, tt, batch, pos, pos_T, edge_index)

    # h_t is one-hots + exact bitcast t -> essentially exact
    np.testing.assert_allclose(np.asarray(h_t), np.asarray(h_t_ref),
                               rtol=1e-6, atol=1e-6)
    # z_t: in-kernel MXU f32 matmul may run at TPU default (reduced) precision;
    # reference is Precision.HIGHEST -> allow a little slack.
    np.testing.assert_allclose(np.asarray(z_t), np.asarray(z_t_ref),
                               rtol=3e-3, atol=2e-3)
    np.testing.assert_allclose(np.asarray(dist), np.asarray(d_ref),
                               rtol=1e-4, atol=1e-5)
    np.testing.assert_allclose(np.asarray(dist_T), np.asarray(dT_ref),
                               rtol=1e-4, atol=1e-5)
    np.testing.assert_allclose(np.asarray(edge_attr), np.asarray(edge_attr_ref),
                               rtol=2e-3, atol=1e-4)
    assert np.all(np.isfinite(np.asarray(edge_packed)))
    assert np.all(np.isfinite(np.asarray(z_t)))

    print("KERNEL_OK")
</pallas_src>

<mosaic_0001>
module attributes {stable_mosaic.version = 11 : i64} {
  func.func @edge_kernel(%arg0: i32, %arg1: memref<6x8x128xf32, #tpu.memory_space<vmem>>, %arg2: memref<6x8x128xf32, #tpu.memory_space<vmem>>, %arg3: memref<8x8x128xf32, #tpu.memory_space<vmem>>) attributes {dimension_semantics = [#tpu.dimension_semantics<parallel>], iteration_bounds = array<i64: 1>, scalar_prefetch = 0 : i64, scratch_operands = 0 : i64, tpu.core_type = #tpu.core_type<tc>, window_params = [{transform_indices = @transform_0, window_bounds = array<i64: 6, 8, 128>}, {transform_indices = @transform_1, window_bounds = array<i64: 6, 8, 128>}, {transform_indices = @transform_2, window_bounds = array<i64: 8, 8, 128>}]} {
    %c0 = arith.constant 0 : index
    %c0_0 = arith.constant 0 : index
    %c0_1 = arith.constant 0 : index
    %0 = vector.load %arg1[%c0, %c0_0, %c0_1] : memref<6x8x128xf32, #tpu.memory_space<vmem>>, vector<6x8x128xf32>
    %c0_2 = arith.constant 0 : index
    %c0_3 = arith.constant 0 : index
    %c0_4 = arith.constant 0 : index
    %1 = vector.load %arg2[%c0_2, %c0_3, %c0_4] : memref<6x8x128xf32, #tpu.memory_space<vmem>>, vector<6x8x128xf32>
    %2 = arith.subf %0, %1 : vector<6x8x128xf32>
    %3 = arith.mulf %2, %2 : vector<6x8x128xf32>
    %4 = vector.extract_strided_slice %3 {offsets = [0, 0, 0], sizes = [1, 8, 128], strides = [1, 1, 1]} : vector<6x8x128xf32> to vector<1x8x128xf32>
    %5 = vector.shape_cast %4 : vector<1x8x128xf32> to vector<8x128xf32>
    %6 = vector.extract_strided_slice %3 {offsets = [1, 0, 0], sizes = [1, 8, 128], strides = [1, 1, 1]} : vector<6x8x128xf32> to vector<1x8x128xf32>
    %7 = vector.shape_cast %6 : vector<1x8x128xf32> to vector<8x128xf32>
    %8 = arith.addf %5, %7 : vector<8x128xf32>
    %9 = vector.extract_strided_slice %3 {offsets = [2, 0, 0], sizes = [1, 8, 128], strides = [1, 1, 1]} : vector<6x8x128xf32> to vector<1x8x128xf32>
    %10 = vector.shape_cast %9 : vector<1x8x128xf32> to vector<8x128xf32>
    %11 = arith.addf %8, %10 : vector<8x128xf32>
    %12 = vector.extract_strided_slice %3 {offsets = [3, 0, 0], sizes = [1, 8, 128], strides = [1, 1, 1]} : vector<6x8x128xf32> to vector<1x8x128xf32>
    %13 = vector.shape_cast %12 : vector<1x8x128xf32> to vector<8x128xf32>
    %14 = vector.extract_strided_slice %3 {offsets = [4, 0, 0], sizes = [1, 8, 128], strides = [1, 1, 1]} : vector<6x8x128xf32> to vector<1x8x128xf32>
    %15 = vector.shape_cast %14 : vector<1x8x128xf32> to vector<8x128xf32>
    %16 = arith.addf %13, %15 : vector<8x128xf32>
    %17 = vector.extract_strided_slice %3 {offsets = [5, 0, 0], sizes = [1, 8, 128], strides = [1, 1, 1]} : vector<6x8x128xf32> to vector<1x8x128xf32>
    %18 = vector.shape_cast %17 : vector<1x8x128xf32> to vector<8x128xf32>
    %19 = arith.addf %16, %18 : vector<8x128xf32>
    %cst = arith.constant 9.99999996E-13 : f32
    %20 = vector.broadcast %cst : f32 to vector<8x128xf32>
    %21 = arith.addf %11, %20 : vector<8x128xf32>
    %22 = math.rsqrt %21 : vector<8x128xf32>
    %cst_5 = arith.constant 9.99999996E-13 : f32
    %23 = vector.broadcast %cst_5 : f32 to vector<8x128xf32>
    %24 = arith.addf %19, %23 : vector<8x128xf32>
    %25 = math.rsqrt %24 : vector<8x128xf32>
    %26 = arith.mulf %11, %22 : vector<8x128xf32>
    %27 = arith.mulf %19, %25 : vector<8x128xf32>
    %c0_6 = arith.constant 0 : index
    %c0_7 = arith.constant 0 : index
    %c0_8 = arith.constant 0 : index
    %28 = vector.load %arg3[%c0_6, %c0_7, %c0_8] : memref<8x8x128xf32, #tpu.memory_space<vmem>>, vector<1x8x128xf32>
    %29 = vector.shape_cast %28 : vector<1x8x128xf32> to vector<8x128xf32>
    %30 = vector.shape_cast %26 : vector<8x128xf32> to vector<1x8x128xf32>
    tpu.vector_store %arg3[%c0_6, %c0_7, %c0_8], %30 {strides = array<i32>} : memref<8x8x128xf32, #tpu.memory_space<vmem>>, vector<1x8x128xf32>,
    %c1 = arith.constant 1 : index
    %c0_9 = arith.constant 0 : index
    %c0_10 = arith.constant 0 : index
    %31 = vector.load %arg3[%c1, %c0_9, %c0_10] : memref<8x8x128xf32, #tpu.memory_space<vmem>>, vector<1x8x128xf32>
    %32 = vector.shape_cast %31 : vector<1x8x128xf32> to vector<8x128xf32>
    %33 = vector.shape_cast %27 : vector<8x128xf32> to vector<1x8x128xf32>
    tpu.vector_store %arg3[%c1, %c0_9, %c0_10], %33 {strides = array<i32>} : memref<8x8x128xf32, #tpu.memory_space<vmem>>, vector<1x8x128xf32>,
    %cst_11 = arith.constant 1.000000e+00 : f32
    %34 = vector.broadcast %cst_11 : f32 to vector<8x128xf32>
    %35 = arith.subf %26, %34 : vector<8x128xf32>
    %cst_12 = arith.constant -1.700000e+00 : f32
    %36 = vector.broadcast %cst_12 : f32 to vector<8x128xf32>
    %37 = arith.mulf %36, %35 : vector<8x128xf32>
    %38 = math.exp %37 : vector<8x128xf32>
    %c2 = arith.constant 2 : index
    %c0_13 = arith.constant 0 : index
    %c0_14 = arith.constant 0 : index
    %39 = vector.load %arg3[%c2, %c0_13, %c0_14] : memref<8x8x128xf32, #tpu.memory_space<vmem>>, vector<1x8x128xf32>
    %40 = vector.shape_cast %39 : vector<1x8x128xf32> to vector<8x128xf32>
    %41 = vector.shape_cast %38 : vector<8x128xf32> to vector<1x8x128xf32>
    tpu.vector_store %arg3[%c2, %c0_13, %c0_14], %41 {strides = array<i32>} : memref<8x8x128xf32, #tpu.memory_space<vmem>>, vector<1x8x128xf32>,
    %cst_15 = arith.constant 0.899999976 : f32
    %42 = vector.broadcast %cst_15 : f32 to vector<8x128xf32>
    %43 = arith.mulf %42, %22 : vector<8x128xf32>
    %c3 = arith.constant 3 : index
    %c0_16 = arith.constant 0 : index
    %c0_17 = arith.constant 0 : index
    %44 = vector.load %arg3[%c3, %c0_16, %c0_17] : memref<8x8x128xf32, #tpu.memory_space<vmem>>, vector<1x8x128xf32>
    %45 = vector.shape_cast %44 : vector<1x8x128xf32> to vector<8x128xf32>
    %46 = vector.shape_cast %43 : vector<8x128xf32> to vector<1x8x128xf32>
    tpu.vector_store %arg3[%c3, %c0_16, %c0_17], %46 {strides = array<i32>} : memref<8x8x128xf32, #tpu.memory_space<vmem>>, vector<1x8x128xf32>,
    %cst_18 = arith.constant 3.000000e-01 : f32
    %47 = vector.broadcast %cst_18 : f32 to vector<8x128xf32>
    %48 = arith.mulf %47, %26 : vector<8x128xf32>
    %c4 = arith.constant 4 : index
    %c0_19 = arith.constant 0 : index
    %c0_20 = arith.constant 0 : index
    %49 = vector.load %arg3[%c4, %c0_19, %c0_20] : memref<8x8x128xf32, #tpu.memory_space<vmem>>, vector<1x8x128xf32>
    %50 = vector.shape_cast %49 : vector<1x8x128xf32> to vector<8x128xf32>
    %51 = vector.shape_cast %48 : vector<8x128xf32> to vector<1x8x128xf32>
    tpu.vector_store %arg3[%c4, %c0_19, %c0_20], %51 {strides = array<i32>} : memref<8x8x128xf32, #tpu.memory_space<vmem>>, vector<1x8x128xf32>,
    %cst_21 = arith.constant 1.000000e+00 : f32
    %52 = vector.broadcast %cst_21 : f32 to vector<8x128xf32>
    %53 = arith.subf %27, %52 : vector<8x128xf32>
    %cst_22 = arith.constant -1.700000e+00 : f32
    %54 = vector.broadcast %cst_22 : f32 to vector<8x128xf32>
    %55 = arith.mulf %54, %53 : vector<8x128xf32>
    %56 = math.exp %55 : vector<8x128xf32>
    %c5 = arith.constant 5 : index
    %c0_23 = arith.constant 0 : index
    %c0_24 = arith.constant 0 : index
    %57 = vector.load %arg3[%c5, %c0_23, %c0_24] : memref<8x8x128xf32, #tpu.memory_space<vmem>>, vector<1x8x128xf32>
    %58 = vector.shape_cast %57 : vector<1x8x128xf32> to vector<8x128xf32>
    %59 = vector.shape_cast %56 : vector<8x128xf32> to vector<1x8x128xf32>
    tpu.vector_store %arg3[%c5, %c0_23, %c0_24], %59 {strides = array<i32>} : memref<8x8x128xf32, #tpu.memory_space<vmem>>, vector<1x8x128xf32>,
    %cst_25 = arith.constant 0.899999976 : f32
    %60 = vector.broadcast %cst_25 : f32 to vector<8x128xf32>
    %61 = arith.mulf %60, %25 : vector<8x128xf32>
    %c6 = arith.constant 6 : index
    %c0_26 = arith.constant 0 : index
    %c0_27 = arith.constant 0 : index
    %62 = vector.load %arg3[%c6, %c0_26, %c0_27] : memref<8x8x128xf32, #tpu.memory_space<vmem>>, vector<1x8x128xf32>
    %63 = vector.shape_cast %62 : vector<1x8x128xf32> to vector<8x128xf32>
    %64 = vector.shape_cast %61 : vector<8x128xf32> to vector<1x8x128xf32>
    tpu.vector_store %arg3[%c6, %c0_26, %c0_27], %64 {strides = array<i32>} : memref<8x8x128xf32, #tpu.memory_space<vmem>>, vector<1x8x128xf32>,
    %cst_28 = arith.constant 3.000000e-01 : f32
    %65 = vector.broadcast %cst_28 : f32 to vector<8x128xf32>
    %66 = arith.mulf %65, %27 : vector<8x128xf32>
    %c7 = arith.constant 7 : index
    %c0_29 = arith.constant 0 : index
    %c0_30 = arith.constant 0 : index
    %67 = vector.load %arg3[%c7, %c0_29, %c0_30] : memref<8x8x128xf32, #tpu.memory_space<vmem>>, vector<1x8x128xf32>
    %68 = vector.shape_cast %67 : vector<1x8x128xf32> to vector<8x128xf32>
    %69 = vector.shape_cast %66 : vector<8x128xf32> to vector<1x8x128xf32>
    tpu.vector_store %arg3[%c7, %c0_29, %c0_30], %69 {strides = array<i32>} : memref<8x8x128xf32, #tpu.memory_space<vmem>>, vector<1x8x128xf32>,
    return
  }
  func.func @transform_0(%arg0: i32) -> (i32, i32, i32) {
    %c0_i32 = arith.constant 0 : i32
    %c0_i32_0 = arith.constant 0 : i32
    %c0_i32_1 = arith.constant 0 : i32
    return %c0_i32, %arg0, %c0_i32_0 : i32, i32, i32
  }
  func.func @transform_1(%arg0: i32) -> (i32, i32, i32) {
    %c0_i32 = arith.constant 0 : i32
    %c0_i32_0 = arith.constant 0 : i32
    %c0_i32_1 = arith.constant 0 : i32
    return %c0_i32, %arg0, %c0_i32_0 : i32, i32, i32
  }
  func.func @transform_2(%arg0: i32) -> (i32, i32, i32) {
    %c0_i32 = arith.constant 0 : i32
    %c0_i32_0 = arith.constant 0 : i32
    %c0_i32_1 = arith.constant 0 : i32
    return %c0_i32, %arg0, %c0_i32_0 : i32, i32, i32
  }
}

module attributes {stable_mosaic.version = 11 : i64} {
  func.func @node_kernel(%arg0: i32, %arg1: memref<8x10xi32, #tpu.memory_space<vmem>>, %arg2: memref<128x128xf32, #tpu.memory_space<vmem>>, %arg3: memref<1x128xf32, #tpu.memory_space<vmem>>, %arg4: memref<1x128xf32, #tpu.memory_space<vmem>>, %arg5: memref<8x128xf32, #tpu.memory_space<vmem>>) attributes {dimension_semantics = [#tpu.dimension_semantics<parallel>], iteration_bounds = array<i64: 2>, scalar_prefetch = 0 : i64, scratch_operands = 0 : i64, tpu.core_type = #tpu.core_type<tc>, window_params = [{transform_indices = @transform_0, window_bounds = array<i64: 8, 10>}, {pipeline_mode = #tpu.pipeline_mode<synchronous>, transform_indices = @transform_1, window_bounds = array<i64: 128, 128>}, {pipeline_mode = #tpu.pipeline_mode<synchronous>, transform_indices = @transform_2, window_bounds = array<i64: 1, 128>}, {pipeline_mode = #tpu.pipeline_mode<synchronous>, transform_indices = @transform_3, window_bounds = array<i64: 1, 128>}, {transform_indices = @transform_4, window_bounds = array<i64: 8, 128>}]} {
    %c0 = arith.constant 0 : index
    %c0_0 = arith.constant 0 : index
    %0 = vector.load %arg1[%c0, %c0_0] : memref<8x10xi32, #tpu.memory_space<vmem>>, vector<8x10xi32>
    %1 = tpu.iota {dimensions = array<i32: 1>} : vector<8x128xi32>
    %2 = vector.extract_strided_slice %0 {offsets = [0, 0], sizes = [8, 1], strides = [1, 1]} : vector<8x10xi32> to vector<8x1xi32>
    %3 = vector.broadcast %2 : vector<8x1xi32> to vector<8x128xi32>
    %4 = arith.cmpi eq, %3, %1 : vector<8x128xi32>
    %5 = arith.extui %4 : vector<8x128xi1> to vector<8x128xi32>
    %6 = arith.sitofp %5 : vector<8x128xi32> to vector<8x128xf32>
    %7 = vector.extract_strided_slice %0 {offsets = [0, 1], sizes = [8, 1], strides = [1, 1]} : vector<8x10xi32> to vector<8x1xi32>
    %8 = vector.broadcast %7 : vector<8x1xi32> to vector<8x128xi32>
    %9 = arith.cmpi eq, %8, %1 : vector<8x128xi32>
    %10 = arith.extui %9 : vector<8x128xi1> to vector<8x128xi32>
    %11 = arith.sitofp %10 : vector<8x128xi32> to vector<8x128xf32>
    %12 = arith.addf %6, %11 : vector<8x128xf32>
    %13 = vector.extract_strided_slice %0 {offsets = [0, 2], sizes = [8, 1], strides = [1, 1]} : vector<8x10xi32> to vector<8x1xi32>
    %14 = vector.broadcast %13 : vector<8x1xi32> to vector<8x128xi32>
    %15 = arith.cmpi eq, %14, %1 : vector<8x128xi32>
    %16 = arith.extui %15 : vector<8x128xi1> to vector<8x128xi32>
    %17 = arith.sitofp %16 : vector<8x128xi32> to vector<8x128xf32>
    %18 = arith.addf %12, %17 : vector<8x128xf32>
    %19 = vector.extract_strided_slice %0 {offsets = [0, 3], sizes = [8, 1], strides = [1, 1]} : vector<8x10xi32> to vector<8x1xi32>
    %20 = vector.broadcast %19 : vector<8x1xi32> to vector<8x128xi32>
    %21 = arith.cmpi eq, %20, %1 : vector<8x128xi32>
    %22 = arith.extui %21 : vector<8x128xi1> to vector<8x128xi32>
    %23 = arith.sitofp %22 : vector<8x128xi32> to vector<8x128xf32>
    %24 = arith.addf %18, %23 : vector<8x128xf32>
    %25 = vector.extract_strided_slice %0 {offsets = [0, 4], sizes = [8, 1], strides = [1, 1]} : vector<8x10xi32> to vector<8x1xi32>
    %26 = vector.broadcast %25 : vector<8x1xi32> to vector<8x128xi32>
    %27 = arith.cmpi eq, %26, %1 : vector<8x128xi32>
    %28 = arith.extui %27 : vector<8x128xi1> to vector<8x128xi32>
    %29 = arith.sitofp %28 : vector<8x128xi32> to vector<8x128xf32>
    %30 = arith.addf %24, %29 : vector<8x128xf32>
    %31 = vector.extract_strided_slice %0 {offsets = [0, 5], sizes = [8, 1], strides = [1, 1]} : vector<8x10xi32> to vector<8x1xi32>
    %32 = vector.broadcast %31 : vector<8x1xi32> to vector<8x128xi32>
    %33 = arith.cmpi eq, %32, %1 : vector<8x128xi32>
    %34 = arith.extui %33 : vector<8x128xi1> to vector<8x128xi32>
    %35 = arith.sitofp %34 : vector<8x128xi32> to vector<8x128xf32>
    %36 = arith.addf %30, %35 : vector<8x128xf32>
    %37 = vector.extract_strided_slice %0 {offsets = [0, 6], sizes = [8, 1], strides = [1, 1]} : vector<8x10xi32> to vector<8x1xi32>
    %38 = vector.broadcast %37 : vector<8x1xi32> to vector<8x128xi32>
    %39 = arith.cmpi eq, %38, %1 : vector<8x128xi32>
    %40 = arith.extui %39 : vector<8x128xi1> to vector<8x128xi32>
    %41 = arith.sitofp %40 : vector<8x128xi32> to vector<8x128xf32>
    %42 = arith.addf %36, %41 : vector<8x128xf32>
    %43 = vector.extract_strided_slice %0 {offsets = [0, 7], sizes = [8, 1], strides = [1, 1]} : vector<8x10xi32> to vector<8x1xi32>
    %44 = vector.broadcast %43 : vector<8x1xi32> to vector<8x128xi32>
    %45 = arith.cmpi eq, %44, %1 : vector<8x128xi32>
    %46 = arith.extui %45 : vector<8x128xi1> to vector<8x128xi32>
    %47 = arith.sitofp %46 : vector<8x128xi32> to vector<8x128xf32>
    %48 = arith.addf %42, %47 : vector<8x128xf32>
    %49 = vector.extract_strided_slice %0 {offsets = [0, 8], sizes = [8, 1], strides = [1, 1]} : vector<8x10xi32> to vector<8x1xi32>
    %50 = vector.broadcast %49 : vector<8x1xi32> to vector<8x128xi32>
    %51 = arith.cmpi eq, %50, %1 : vector<8x128xi32>
    %52 = arith.extui %51 : vector<8x128xi1> to vector<8x128xi32>
    %53 = arith.sitofp %52 : vector<8x128xi32> to vector<8x128xf32>
    %54 = arith.addf %48, %53 : vector<8x128xf32>
    %55 = vector.extract_strided_slice %0 {offsets = [0, 9], sizes = [8, 1], strides = [1, 1]} : vector<8x10xi32> to vector<8x1xi32>
    %56 = tpu.bitcast %55 : vector<8x1xi32> -> vector<8x1xf32>
    %c0_1 = arith.constant 0 : index
    %c0_2 = arith.constant 0 : index
    %57 = vector.load %arg2[%c0_1, %c0_2] : memref<128x128xf32, #tpu.memory_space<vmem>>, vector<128x128xf32>
    %cst = arith.constant dense<0.000000e+00> : vector<8x128xf32>
    %58 = tpu.matmul %54, %57, %cst {dimension_numbers = #tpu.dot_dimension_numbers<[1], [0], [0], [1], [0, 0, 1, 1], [], []>} : vector<8x128xf32>, vector<128x128xf32>, vector<8x128xf32> -> vector<8x128xf32>
    %c0_3 = arith.constant 0 : index
    %c0_4 = arith.constant 0 : index
    %59 = vector.load %arg3[%c0_3, %c0_4] : memref<1x128xf32, #tpu.memory_space<vmem>>, vector<1x128xf32>
    %60 = vector.broadcast %56 : vector<8x1xf32> to vector<8x128xf32>
    %61 = vector.broadcast %59 : vector<1x128xf32> to vector<8x128xf32>
    %62 = arith.mulf %60, %61 : vector<8x128xf32>
    %63 = arith.addf %58, %62 : vector<8x128xf32>
    %c0_5 = arith.constant 0 : index
    %c0_6 = arith.constant 0 : index
    %64 = vector.load %arg4[%c0_5, %c0_6] : memref<1x128xf32, #tpu.memory_space<vmem>>, vector<1x128xf32>
    %65 = vector.broadcast %64 : vector<1x128xf32> to vector<8x128xf32>
    %66 = arith.addf %63, %65 : vector<8x128xf32>
    %c90_i32 = arith.constant 90 : i32
    %67 = vector.broadcast %c90_i32 : i32 to vector<8x128xi32>
    %68 = arith.cmpi eq, %1, %67 : vector<8x128xi32>
    %cst_7 = arith.constant 0.000000e+00 : f32
    %69 = vector.shape_cast %56 : vector<8x1xf32> to vector<8x1xf32>
    %70 = vector.broadcast %69 : vector<8x1xf32> to vector<8x128xf32>
    %71 = vector.broadcast %cst_7 : f32 to vector<8x128xf32>
    %72 = arith.select %68, %70, %71 : vector<8x128xi1>, vector<8x128xf32>
    %73 = arith.addf %54, %72 : vector<8x128xf32>
    %74 = arith.addf %73, %66 : vector<8x128xf32>
    %c0_8 = arith.constant 0 : index
    %c0_9 = arith.constant 0 : index
    %75 = vector.load %arg5[%c0_8, %c0_9] : memref<8x128xf32, #tpu.memory_space<vmem>>, vector<8x128xf32>
    tpu.vector_store %arg5[%c0_8, %c0_9], %74 {strides = array<i32>} : memref<8x128xf32, #tpu.memory_space<vmem>>, vector<8x128xf32>,
    return
  }
  func.func @transform_0(%arg0: i32) -> (i32, i32) {
    %c0_i32 = arith.constant 0 : i32
    %c0_i32_0 = arith.constant 0 : i32
    return %arg0, %c0_i32 : i32, i32
  }
  func.func @transform_1(%arg0: i32) -> (i32, i32) {
    %c0_i32 = arith.constant 0 : i32
    %c0_i32_0 = arith.constant 0 : i32
    %c0_i32_1 = arith.constant 0 : i32
    return %c0_i32, %c0_i32_0 : i32, i32
  }
  func.func @transform_2(%arg0: i32) -> (i32, i32) {
    %c0_i32 = arith.constant 0 : i32
    %c0_i32_0 = arith.constant 0 : i32
    %c0_i32_1 = arith.constant 0 : i32
    return %c0_i32, %c0_i32_0 : i32, i32
  }
  func.func @transform_3(%arg0: i32) -> (i32, i32) {
    %c0_i32 = arith.constant 0 : i32
    %c0_i32_0 = arith.constant 0 : i32
    %c0_i32_1 = arith.constant 0 : i32
    return %c0_i32, %c0_i32_0 : i32, i32
  }
  func.func @transform_4(%arg0: i32) -> (i32, i32) {
    %c0_i32 = arith.constant 0 : i32
    %c0_i32_0 = arith.constant 0 : i32
    return %arg0, %c0_i32 : i32, i32
  }
}

</mosaic_0001>

<llo_original>
// kernel: neg.1
$region0: #{neg.1}
  #allocation0 [shape = 's32[1]{0}', space=sflag, size = 0x4, scoped, tag = 'scoped memory for neg.1']
  %s0 = inlined_call_operand.vmem [shape: f32[40,16], index: 0, kind: input, shape index: {}]
  %s1 = inlined_call_operand.vmem [shape: f32[40,16], index: 1, kind: output, shape index: {}]
  %v2 = vld [vmem:[%s0] sm:$0xff]
  %3 = xla_tuple %v2
  %4 = xla_tuple %3
  %v5 = vxor.u32 %v2, 2147483648
  %6 = xla_tuple %v5
  %7 = vst [vmem:[%s1] sm:$0xff] %v5
  %s8 = scalar_lea.vmem %s0, 8
  %v9 = vld [vmem:[%s8] sm:$0xff]
  %10 = xla_tuple %v9
  %11 = xla_tuple %10
  %v12 = vxor.u32 %v9, 2147483648
  %13 = xla_tuple %v12
  %s14 = scalar_lea.vmem %s1, 8
  %15 = vst [vmem:[%s14] sm:$0xff] %v12

// kernel: equivariant_encoder_forward.3
$region0: #{equivariant_encoder_forward.3}
  #allocation0 [shape = 'u32[]', space=smem, size = 0x4, offset = 0x4, fixed_abs, tag = 'smem constant byte address 0x4 - core index']
  #allocation1 [shape = 'u32[72,128]{1,0:T(1,128)}', space=vmem, size = 0x9000, scoped, tag = 'internal scratch']
  %s0 = inlined_call_operand.vmem [shape: f32[6,8,128], index: 0, kind: input, shape index: {}]
  %s1 = inlined_call_operand.vmem [shape: f32[6,8,128], index: 1, kind: input, shape index: {}]
  %s2 = inlined_call_operand.vmem [shape: f32[8,8,128], index: 2, kind: output, shape index: {}]
  %s3 = sld [smem:[#allocation0]]
  $region18: #{equivariant_encoder_forward.3} parent=0
    _
  %s5 = ssub.s32 1, %s3
  %s6 = scalar_select 0, %s5, %s3
  // Predicated region
  $region2: #{equivariant_encoder_forward.3} parent=0 // pred_check
    _
  $region3: #{equivariant_encoder_forward.3} parent=0 // pred_check_branch
    %8 = sbr.rel (0) target = $region5
  $region4: #{equivariant_encoder_forward.3} parent=0 // pred_region
    _
  $region5: #{equivariant_encoder_forward.3} parent=0 // pred_fallthru
    _
  // Predicated region
  $region6: #{equivariant_encoder_forward.3} parent=0 // pred_check
    _
  $region7: #{equivariant_encoder_forward.3} parent=0 // pred_check_branch
    %10 = sbr.rel (0) target = $region9
  $region8: #{equivariant_encoder_forward.3} parent=0 // pred_region
    _
  $region9: #{equivariant_encoder_forward.3} parent=0 // pred_fallthru
    _
  %v11 = vld [vmem:[%s0] sm:$0xff]
  %v12 = vld [vmem:[%s0 + $0x8] sm:$0xff]
  %v13 = vld [vmem:[%s0 + $0x10] sm:$0xff]
  %v14 = vld [vmem:[%s0 + $0x18] sm:$0xff]
  %v15 = vld [vmem:[%s0 + $0x20] sm:$0xff]
  %v16 = vld [vmem:[%s0 + $0x28] sm:$0xff]
  %v17 = vld [vmem:[%s1] sm:$0xff]
  %v18 = vld [vmem:[%s1 + $0x8] sm:$0xff]
  %v19 = vld [vmem:[%s1 + $0x10] sm:$0xff]
  %v20 = vld [vmem:[%s1 + $0x18] sm:$0xff]
  %v21 = vld [vmem:[%s1 + $0x20] sm:$0xff]
  %v22 = vld [vmem:[%s1 + $0x28] sm:$0xff]
  %v23 = vsub.f32 %v11, %v17
  %v24 = vsub.f32 %v12, %v18
  %v25 = vsub.f32 %v13, %v19
  %v26 = vsub.f32 %v14, %v20
  %v27 = vsub.f32 %v15, %v21
  %v28 = vsub.f32 %v16, %v22
  %v29 = vmul.f32 %v23, %v23
  %v30 = vmul.f32 %v24, %v24
  %v31 = vmul.f32 %v25, %v25
  %v32 = vmul.f32 %v26, %v26
  %v33 = vmul.f32 %v27, %v27
  %v34 = vmul.f32 %v28, %v28
  %v35 = vadd.f32 %v29, %v30
  %v36 = vadd.f32 %v35, %v31
  %v37 = vadd.f32 %v32, %v33
  %v38 = vadd.f32 %v37, %v34
  %v39 = vadd.f32 %v36, 1e-12
  %v40 = vrsqrt.pop %v39
  %v41 = vmul.f32 %v40, %v39
  %v42 = vmul.f32 %v41, %v40
  %v43 = vmul.f32 0.5, %v42
  %v44 = vsub.f32 1.5, %v43
  %v45 = vmul.f32 %v40, %v44
  %vm46 = vweird.f32 %v39
  %vm47 = vweird.f32 %v40
  %vm48 = vmor %vm46, %vm47
  %v49 = vsel %vm48, %v40, %v45
  %v50 = vadd.f32 %v38, 1e-12
  %v51 = vrsqrt.pop %v50
  %v52 = vmul.f32 %v51, %v50
  %v53 = vmul.f32 %v52, %v51
  %v54 = vmul.f32 0.5, %v53
  %v55 = vsub.f32 1.5, %v54
  %v56 = vmul.f32 %v51, %v55
  %vm57 = vweird.f32 %v50
  %vm58 = vweird.f32 %v51
  %vm59 = vmor %vm57, %vm58
  %v60 = vsel %vm59, %v51, %v56
  %v61 = vmul.f32 %v36, %v49
  %v62 = vmul.f32 %v38, %v60
  %63 = vst [vmem:[%s2] sm:$0xff] %v61
  %s64 = scalar_lea.vmem %s2, 8
  %65 = vst [vmem:[%s64] sm:$0xff] %v62
  %v66 = vsub.f32 %v61, 1.0
  %v67 = vmul.f32 %v66, -1.7
  %v68 = vmul.f32 %v67, 1.442695
  %v69 = vpow.pop %v68
  %s70 = scalar_lea.vmem %s2, 16
  %71 = vst [vmem:[%s70] sm:$0xff] %v69
  %v72 = vmul.f32 %v49, 0.9
  %s73 = scalar_lea.vmem %s2, 24
  %74 = vst [vmem:[%s73] sm:$0xff] %v72
  %v75 = vmul.f32 %v61, 0.3
  %s76 = scalar_lea.vmem %s2, 32
  %77 = vst [vmem:[%s76] sm:$0xff] %v75
  %v78 = vsub.f32 %v62, 1.0
  %v79 = vmul.f32 %v78, -1.7
  %v80 = vmul.f32 %v79, 1.442695
  %v81 = vpow.pop %v80
  %s82 = scalar_lea.vmem %s2, 40
  %83 = vst [vmem:[%s82] sm:$0xff] %v81
  %v84 = vmul.f32 %v60, 0.9
  %s85 = scalar_lea.vmem %s2, 48
  %86 = vst [vmem:[%s85] sm:$0xff] %v84
  %v87 = vmul.f32 %v62, 0.3
  %s88 = scalar_lea.vmem %s2, 56
  %89 = vst [vmem:[%s88] sm:$0xff] %v87
  // Predicated region
  $region10: #{equivariant_encoder_forward.3} parent=0 // pred_check
    _
  $region11: #{equivariant_encoder_forward.3} parent=0 // pred_check_branch
    %91 = sbr.rel (0) target = $region13
  $region12: #{equivariant_encoder_forward.3} parent=0 // pred_region
    _
  $region13: #{equivariant_encoder_forward.3} parent=0 // pred_fallthru
    _
  // Predicated region
  $region14: #{equivariant_encoder_forward.3} parent=0 // pred_check
    _
  $region15: #{equivariant_encoder_forward.3} parent=0 // pred_check_branch
    %93 = sbr.rel (0) target = $region17
  $region16: #{equivariant_encoder_forward.3} parent=0 // pred_region
    _
  $region17: #{equivariant_encoder_forward.3} parent=0 // pred_fallthru
    _

// kernel: equivariant_encoder_forward.2
$region0: #{equivariant_encoder_forward.2}
  #allocation0 [shape = 'u32[]', space=smem, size = 0x4, offset = 0x4, fixed_abs, tag = 'smem constant byte address 0x4 - core index']
  #allocation1 [shape = 'u32[72,128]{1,0:T(1,128)}', space=vmem, size = 0x9000, scoped, tag = 'internal scratch']
  %s0 = inlined_call_operand.vmem [shape: s32[16,10], index: 0, kind: input, shape index: {}]
  %s1 = inlined_call_operand.vmem [shape: f32[128,128], index: 1, kind: input, shape index: {}]
  %s2 = inlined_call_operand.vmem [shape: f32[1,128], index: 2, kind: input, shape index: {}]
  %s3 = inlined_call_operand.vmem [shape: f32[1,128], index: 3, kind: input, shape index: {}]
  %s4 = inlined_call_operand.vmem [shape: f32[16,128], index: 4, kind: output, shape index: {}]
  %s5 = sld [smem:[#allocation0]]
  $region49: #{equivariant_encoder_forward.2} parent=0
    _
  %s7 = ssub.s32 1, %s5
  %s8 = scalar_select 0, %s7, %s5
  loop: start=0, step=1, limit=4
  $region2: #{equivariant_encoder_forward.2} parent=0 // loop_pre_header
    _
  $region3: #{equivariant_encoder_forward.2} parent=0 // loop_header
    %s10 = sphi 0, %s14
    %p11 = scmp.ge.s32.totalorder %s10, 4
    %s20 = sphi 0, %s22
    %s23 = sphi 0, %s20
    %s24 = sphi 0, %s23
    %s40 = sphi 0, %s24
    %s44 = sphi 0, %s44
    %s46 = sphi 0, %s44
    %s47 = sphi 0, %s46
    %s61 = sphi 0, %s47
    %s65 = sphi 0, %s65
    %s67 = sphi 0, %s65
    %s68 = sphi 0, %s67
    %s82 = sphi 0, %s68
    %s86 = sphi 0, %s86
    %s88 = sphi 0, %s86
    %s89 = sphi 0, %s88
    %s103 = sphi 0, %s89
    %s109 = sphi 0, %s111
    %s112 = sphi 0, %s109
    %s113 = sphi 0, %s112
    %s129 = sphi 0, %s113
  $region4: #{equivariant_encoder_forward.2} parent=0 // loop_header_branch
    %13 = sbr.rel (%p11) target = $region8
  $region5: #{equivariant_encoder_forward.2} parent=0 // loop_body
    %s15 = ssub.s32 %s10, 1
    %s16 = ssub.s32 %s10, 2
    %s17 = sadd.s32 %s10, 1
    %s18 = ssub.s32 %s10, %s17
    %p19 = scmp.eq.s32.totalorder %s18, 0
    %s21 = sadd.s32 %s20, 1
    %s22 = scalar_select %p19, %s20, %s21
    %p25 = pneg %p19
    %p26 = scmp.eq.s32.totalorder %s10, 1
    %p27 = por %p25, %p26
    %p28 = scmp.ne.s32.totalorder %s20, %s23
    %p29 = scmp.eq.s32.totalorder %s10, 0
    %p30 = por %p28, %p29
    %p31 = scmp.ne.s32.totalorder %s20, %s23
    %p32 = scmp.eq.s32.totalorder %s15, 1
    %p33 = por %p31, %p32
    %p34 = scmp.ne.s32.totalorder %s23, %s24
    %p35 = scmp.eq.s32.totalorder %s15, 0
    %p36 = por %p34, %p35
    %p37 = scmp.ne.s32.totalorder %s23, %s24
    %p38 = scmp.eq.s32.totalorder %s16, 1
    %p39 = por %p37, %p38
    %p41 = scmp.ne.s32.totalorder %s24, %s40
    %p42 = scmp.eq.s32.totalorder %s16, 0
    %p43 = por %p41, %p42
    %s45 = sadd.s32 %s44, 1
    %p48 = scmp.eq.s32.totalorder %s10, 1
    %p49 = scmp.ne.s32.totalorder %s44, %s46
    %p50 = scmp.eq.s32.totalorder %s10, 0
    %p51 = por %p49, %p50
    %p52 = scmp.ne.s32.totalorder %s44, %s46
    %p53 = scmp.eq.s32.totalorder %s15, 1
    %p54 = por %p52, %p53
    %p55 = scmp.ne.s32.totalorder %s46, %s47
    %p56 = scmp.eq.s32.totalorder %s15, 0
    %p57 = por %p55, %p56
    %p58 = scmp.ne.s32.totalorder %s46, %s47
    %p59 = scmp.eq.s32.totalorder %s16, 1
    %p60 = por %p58, %p59
    %p62 = scmp.ne.s32.totalorder %s47, %s61
    %p63 = scmp.eq.s32.totalorder %s16, 0
    %p64 = por %p62, %p63
    %s66 = sadd.s32 %s65, 1
    %p69 = scmp.eq.s32.totalorder %s10, 1
    %p70 = scmp.ne.s32.totalorder %s65, %s67
    %p71 = scmp.eq.s32.totalorder %s10, 0
    %p72 = por %p70, %p71
    %p73 = scmp.ne.s32.totalorder %s65, %s67
    %p74 = scmp.eq.s32.totalorder %s15, 1
    %p75 = por %p73, %p74
    %p76 = scmp.ne.s32.totalorder %s67, %s68
    %p77 = scmp.eq.s32.totalorder %s15, 0
    %p78 = por %p76, %p77
    %p79 = scmp.ne.s32.totalorder %s67, %s68
    %p80 = scmp.eq.s32.totalorder %s16, 1
    %p81 = por %p79, %p80
    %p83 = scmp.ne.s32.totalorder %s68, %s82
    %p84 = scmp.eq.s32.totalorder %s16, 0
    %p85 = por %p83, %p84
    %s87 = sadd.s32 %s86, 1
    %p90 = scmp.eq.s32.totalorder %s10, 1
    %p91 = scmp.ne.s32.totalorder %s86, %s88
    %p92 = scmp.eq.s32.totalorder %s10, 0
    %p93 = por %p91, %p92
    %p94 = scmp.ne.s32.totalorder %s86, %s88
    %p95 = scmp.eq.s32.totalorder %s15, 1
    %p96 = por %p94, %p95
    %p97 = scmp.ne.s32.totalorder %s88, %s89
    %p98 = scmp.eq.s32.totalorder %s15, 0
    %p99 = por %p97, %p98
    %p100 = scmp.ne.s32.totalorder %s88, %s89
    %p101 = scmp.eq.s32.totalorder %s16, 1
    %p102 = por %p100, %p101
    %p104 = scmp.ne.s32.totalorder %s89, %s103
    %p105 = scmp.eq.s32.totalorder %s16, 0
    %p106 = por %p104, %p105
    %s107 = ssub.s32 %s10, %s17
    %p108 = scmp.eq.s32.totalorder %s107, 0
    %s110 = sadd.s32 %s109, 1
    %s111 = scalar_select %p108, %s109, %s110
    %p114 = pneg %p108
    %p115 = scmp.eq.s32.totalorder %s10, 1
    %p116 = por %p114, %p115
    %p117 = scmp.ne.s32.totalorder %s109, %s112
    %p118 = scmp.eq.s32.totalorder %s10, 0
    %p119 = por %p117, %p118
    %p120 = scmp.ne.s32.totalorder %s109, %s112
    %p121 = scmp.eq.s32.totalorder %s15, 1
    %p122 = por %p120, %p121
    %p123 = scmp.ne.s32.totalorder %s112, %s113
    %p124 = scmp.eq.s32.totalorder %s15, 0
    %p125 = por %p123, %p124
    %p126 = scmp.ne.s32.totalorder %s112, %s113
    %p127 = scmp.eq.s32.totalorder %s16, 1
    %p128 = por %p126, %p127
    %p130 = scmp.ne.s32.totalorder %s113, %s129
    %p131 = scmp.eq.s32.totalorder %s16, 0
    %p132 = por %p130, %p131
    %p133 = scmp.le.s32.totalorder 1, %s10
    %p134 = scmp.lt.s32.totalorder %s10, 3
    %p135 = pnand %p133, %p134
    %p136 = pneg %p135
    // Predicated region
    $region9: #{equivariant_encoder_forward.2} parent=5 // pred_check
      _
    $region10: #{equivariant_encoder_forward.2} parent=5 // pred_check_branch
      %138 = sbr.rel (%p135) target = $region12
    $region11: #{equivariant_encoder_forward.2} parent=5 // pred_region
      %s139 = ssub.s32 %s10, 1
      // Predicated region
      $region13: #{equivariant_encoder_forward.2} parent=11 // pred_check
        %p140 = pneg %p57
      $region14: #{equivariant_encoder_forward.2} parent=11 // pred_check_branch
        %142 = sbr.rel (%p140) target = $region16
      $region15: #{equivariant_encoder_forward.2} parent=11 // pred_region
        _
      $region16: #{equivariant_encoder_forward.2} parent=11 // pred_fallthru
        _
      // Predicated region
      $region17: #{equivariant_encoder_forward.2} parent=11 // pred_check
        %p143 = pneg %p78
      $region18: #{equivariant_encoder_forward.2} parent=11 // pred_check_branch
        %145 = sbr.rel (%p143) target = $region20
      $region19: #{equivariant_encoder_forward.2} parent=11 // pred_region
        _
      $region20: #{equivariant_encoder_forward.2} parent=11 // pred_fallthru
        _
      // Predicated region
      $region21: #{equivariant_encoder_forward.2} parent=11 // pred_check
        %p146 = pneg %p99
      $region22: #{equivariant_encoder_forward.2} parent=11 // pred_check_branch
        %148 = sbr.rel (%p146) target = $region24
      $region23: #{equivariant_encoder_forward.2} parent=11 // pred_region
        _
      $region24: #{equivariant_encoder_forward.2} parent=11 // pred_fallthru
        _
    $region12: #{equivariant_encoder_forward.2} parent=5 // pred_fallthru
      _
    %p149 = scmp.lt.s32.totalorder %s10, 2
    // Predicated region
    $region25: #{equivariant_encoder_forward.2} parent=5 // pred_check
      %p150 = pneg %p149
    $region26: #{equivariant_encoder_forward.2} parent=5 // pred_check_branch
      %152 = sbr.rel (%p150) target = $region28
    $region27: #{equivariant_encoder_forward.2} parent=5 // pred_region
      // Predicated region
      $region29: #{equivariant_encoder_forward.2} parent=27 // pred_check
        %p153 = pneg %p30
      $region30: #{equivariant_encoder_forward.2} parent=27 // pred_check_branch
        %155 = sbr.rel (%p153) target = $region32
      $region31: #{equivariant_encoder_forward.2} parent=27 // pred_region
        %p156 = scmp.lt.s32.totalorder %s10, 1
        %s157 = scalar_select %p156, %s10, 1
        %s158 = smul.addr %s157, 8
        %s159 = scalar_lea.vmem %s0, %s158
      $region32: #{equivariant_encoder_forward.2} parent=27 // pred_fallthru
        _
    $region28: #{equivariant_encoder_forward.2} parent=5 // pred_fallthru
      _
    %p160 = scmp.le.s32.totalorder 1, %s10
    %p161 = scmp.lt.s32.totalorder %s10, 3
    %p162 = pnand %p160, %p161
    %p163 = pneg %p162
    // Predicated region
    $region33: #{equivariant_encoder_forward.2} parent=5 // pred_check
      _
    $region34: #{equivariant_encoder_forward.2} parent=5 // pred_check_branch
      %165 = sbr.rel (%p162) target = $region36
    $region35: #{equivariant_encoder_forward.2} parent=5 // pred_region
      %s166 = ssub.s32 %s10, 1
      %p167 = scmp.lt.s32.totalorder %s15, 1
      %s168 = scalar_select %p167, %s15, 1
      %s169 = smul.addr %s168, 8
      %s170 = scalar_lea.vmem %s0, %s169
      %p171 = pneg %p36
      %p172 = pneg %p33
      %p173 = pneg %p57
      %p174 = pneg %p54
      %p175 = pneg %p78
      %p176 = pneg %p75
      %p177 = pneg %p99
      %p178 = pneg %p96
      %p179 = pneg %p125
      %p180 = pneg %p122
      %p181 = scmp.lt.s32.totalorder %s15, 1
      %s182 = scalar_select %p181, %s15, 1
      %s183 = smul.addr %s182, 8
      %s184 = scalar_lea.vmem %s4, %s183
      %p185 = scmp.lt.s32.totalorder %s15, 1
      %s186 = scalar_select %p185, %s15, 1
      %s187 = smul.addr %s186, 8
      %s188 = scalar_lea.vmem %s0, %s187
      %p189 = scmp.lt.s32.totalorder %s15, 1
      %s190 = scalar_select %p189, %s15, 1
      %s191 = smul.addr %s190, 8
      %s192 = scalar_lea.vmem %s4, %s191
      %v193 = vld [vmem:[%s188] sm:$0xff]
      %v194 = vlaneseq
      %v195 = vand.u32 %v194, 127
      %196 = vset.pattern.permute.xlu0 0
      %197 = vperm.xlu0 %196, %v193
      %v198 = vpop.permute.xlu0 %197
      %vm199 = vcmp.eq.s32.totalorder %v198, %v195
      %v200 = vsel %vm199, 1, 0
      %v201 = vcvt.s32.f32 %v200
      %202 = vset.pattern.permute.xlu0 1
      %203 = vperm.xlu0 %202, %v193
      %v204 = vpop.permute.xlu0 %203
      %vm205 = vcmp.eq.s32.totalorder %v204, %v195
      %v206 = vsel %vm205, 1, 0
      %v207 = vcvt.s32.f32 %v206
      %v208 = vadd.f32 %v201, %v207
      %209 = vset.pattern.permute.xlu0 2
      %210 = vperm.xlu0 %209, %v193
      %v211 = vpop.permute.xlu0 %210
      %vm212 = vcmp.eq.s32.totalorder %v211, %v195
      %v213 = vsel %vm212, 1, 0
      %v214 = vcvt.s32.f32 %v213
      %v215 = vadd.f32 %v208, %v214
      %216 = vset.pattern.permute.xlu0 3
      %217 = vperm.xlu0 %216, %v193
      %v218 = vpop.permute.xlu0 %217
      %vm219 = vcmp.eq.s32.totalorder %v218, %v195
      %v220 = vsel %vm219, 1, 0
      %v221 = vcvt.s32.f32 %v220
      %v222 = vadd.f32 %v215, %v221
      %223 = vset.pattern.permute.xlu0 4
      %224 = vperm.xlu0 %223, %v193
      %v225 = vpop.permute.xlu0 %224
      %vm226 = vcmp.eq.s32.totalorder %v225, %v195
      %v227 = vsel %vm226, 1, 0
      %v228 = vcvt.s32.f32 %v227
      %v229 = vadd.f32 %v222, %v228
      %230 = vset.pattern.permute.xlu0 5
      %231 = vperm.xlu0 %230, %v193
      %v232 = vpop.permute.xlu0 %231
      %vm233 = vcmp.eq.s32.totalorder %v232, %v195
      %v234 = vsel %vm233, 1, 0
      %v235 = vcvt.s32.f32 %v234
      %v236 = vadd.f32 %v229, %v235
      %237 = vset.pattern.permute.xlu0 6
      %238 = vperm.xlu0 %237, %v193
      %v239 = vpop.permute.xlu0 %238
      %vm240 = vcmp.eq.s32.totalorder %v239, %v195
      %v241 = vsel %vm240, 1, 0
      %v242 = vcvt.s32.f32 %v241
      %v243 = vadd.f32 %v236, %v242
      %244 = vset.pattern.permute.xlu0 7
      %245 = vperm.xlu0 %244, %v193
      %v246 = vpop.permute.xlu0 %245
      %vm247 = vcmp.eq.s32.totalorder %v246, %v195
      %v248 = vsel %vm247, 1, 0
      %v249 = vcvt.s32.f32 %v248
      %v250 = vadd.f32 %v243, %v249
      %251 = vset.pattern.permute.xlu0 8
      %252 = vperm.xlu0 %251, %v193
      %v253 = vpop.permute.xlu0 %252
      %vm254 = vcmp.eq.s32.totalorder %v253, %v195
      %v255 = vsel %vm254, 1, 0
      %v256 = vcvt.s32.f32 %v255
      %v257 = vadd.f32 %v250, %v256
      %v258 = vld [vmem:[%s1] sm:$0xff]
      %v259 = vld [vmem:[%s1 + $0x8] sm:$0xff]
      %v260 = vld [vmem:[%s1 + $0x10] sm:$0xff]
      %v261 = vld [vmem:[%s1 + $0x18] sm:$0xff]
      %v262 = vld [vmem:[%s1 + $0x20] sm:$0xff]
      %v263 = vld [vmem:[%s1 + $0x28] sm:$0xff]
      %v264 = vld [vmem:[%s1 + $0x30] sm:$0xff]
      %v265 = vld [vmem:[%s1 + $0x38] sm:$0xff]
      %v266 = vld [vmem:[%s1 + $0x40] sm:$0xff]
      %v267 = vld [vmem:[%s1 + $0x48] sm:$0xff]
      %v268 = vld [vmem:[%s1 + $0x50] sm:$0xff]
      %v269 = vld [vmem:[%s1 + $0x58] sm:$0xff]
      %v270 = vld [vmem:[%s1 + $0x60] sm:$0xff]
      %v271 = vld [vmem:[%s1 + $0x68] sm:$0xff]
      %v272 = vld [vmem:[%s1 + $0x70] sm:$0xff]
      %v273 = vld [vmem:[%s1 + $0x78] sm:$0xff]
      %v274 = vld [vmem:[%s2] sm:$0x1]
      %275 = vset.pattern.permute.xlu0 9
      %276 = vperm.xlu0 %275, %v193
      %v277 = vpop.permute.xlu0 %276
      %v280 = vperm.slane %v274, 0
      %v282 = vmul.f32 %v277, %v280
      %283 = vmatpush.msra.mxu0 %v273
      %284 = vmatpush.msra.mxu0 %v272
      %285 = vmatpush.msra.mxu0 %v271
      %286 = vmatpush.msra.mxu0 %v270
      %287 = vmatpush.msra.mxu0 %v269
      %288 = vmatpush.msra.mxu0 %v268
      %289 = vmatpush.msra.mxu0 %v267
      %290 = vmatpush.msra.mxu0 %v266
      %291 = vmatpush.msra.mxu0 %v265
      %292 = vmatpush.msra.mxu0 %v264
      %293 = vmatpush.msra.mxu0 %v263
      %294 = vmatpush.msra.mxu0 %v262
      %295 = vmatpush.msra.mxu0 %v261
      %296 = vmatpush.msra.mxu0 %v260
      %297 = vmatpush.msra.mxu0 %v259
      %298 = vmatpush.msra.mxu0 %v258
      %299 = vmatmul.f32.gmra.mxu0 %v257
      %v300 = vpop.f32.mrf.mxu0
      %v301 = vadd.f32 %v282, %v300
      %302 = vdwg.mxu0
      %v303 = vld [vmem:[%s3] sm:$0x1]
      %v305 = vperm.slane %v303, 0
      %v307 = vadd.f32 %v301, %v305
      %vm308 = vcmp.eq.s32.totalorder %v195, 90
      %v309 = vsel %vm308, %v277, 0.0
      %v310 = vadd.f32 %v257, %v309
      %v311 = vadd.f32 %v310, %v307
      %312 = vst [vmem:[%s192] sm:$0xff] %v311
      %p313 = scmp.lt.s32.totalorder %s15, 1
      %s314 = scalar_select %p313, %s15, 1
      %s315 = smul.addr %s314, 8
      %s316 = scalar_lea.vmem %s4, %s315
      // Predicated region
      $region37: #{equivariant_encoder_forward.2} parent=35 // pred_check
        %p317 = pneg %p122
      $region38: #{equivariant_encoder_forward.2} parent=35 // pred_check_branch
        %319 = sbr.rel (%p317) target = $region40
      $region39: #{equivariant_encoder_forward.2} parent=35 // pred_region
        _
      $region40: #{equivariant_encoder_forward.2} parent=35 // pred_fallthru
        _
    $region36: #{equivariant_encoder_forward.2} parent=5 // pred_fallthru
      _
    %p320 = scmp.le.s32.totalorder 2, %s10
    // Predicated region
    $region41: #{equivariant_encoder_forward.2} parent=5 // pred_check
      %p321 = pneg %p320
    $region42: #{equivariant_encoder_forward.2} parent=5 // pred_check_branch
      %323 = sbr.rel (%p321) target = $region44
    $region43: #{equivariant_encoder_forward.2} parent=5 // pred_region
      %s324 = ssub.s32 %s10, 2
      // Predicated region
      $region45: #{equivariant_encoder_forward.2} parent=43 // pred_check
        %p325 = pneg %p128
      $region46: #{equivariant_encoder_forward.2} parent=43 // pred_check_branch
        %327 = sbr.rel (%p325) target = $region48
      $region47: #{equivariant_encoder_forward.2} parent=43 // pred_region
        %p328 = scmp.lt.s32.totalorder %s16, 1
        %s329 = scalar_select %p328, %s16, 1
        %s330 = smul.addr %s329, 8
        %s331 = scalar_lea.vmem %s4, %s330
      $region48: #{equivariant_encoder_forward.2} parent=43 // pred_fallthru
        _
    $region44: #{equivariant_encoder_forward.2} parent=5 // pred_fallthru
      _
  $region6: #{equivariant_encoder_forward.2} parent=0 // loop_footer
    %s14 = sadd.s32 1, %s10
  $region7: #{equivariant_encoder_forward.2} parent=0 // loop_footer_branch
    %9 = sbr.rel target = $region3
  $region8: #{equivariant_encoder_forward.2} parent=0 // loop_exit
    _

</llo_original>
